<compile_context>
chip_gen: v5e
topology: v5e:2x2
jax: 0.10.0
libtpu: 0.0.40
codegen_flags: <defaults>
</compile_context>

<pallas_src>
import functools

import jax
import jax.numpy as jnp
from jax.experimental import pallas as pl
from jax.experimental.pallas import tpu as pltpu

# Model dims (synthetic, small — original MAG-BERT uses 768/47/74).
TEXT_DIM = 32      # hidden_size == TEXT_DIM
VISUAL_DIM = 16
ACOUSTIC_DIM = 16

BETA_SHIFT = 0.5
LN_EPS = 1e-5      # nn.LayerNorm default
EPS = 1e-6         # MAG's eps

LANE = 128         # TPU lane width; folded row width == FOLD * H == 128


def _round_up(x, m):
    return (x + m - 1) // m * m


def mag_kernel(beta_shift, h, v_ref, a_ref, t_ref, wv_ref, wa_ref, wt_ref,
               b_ref, ln_ref, ones_ref, o_ref):
    """MAG forward on row tiles, entirely in the folded layout.

    Folded layout: each 128-lane row holds FOLD = 128 // h logical rows; lane
    group g = [h*g : h*(g+1)] belongs to logical row FOLD*rr + g.  The packed
    weights are built so the fused matmul emits
        z[:, 128*head + h*g + j] = head(logical row FOLD*rr + g)[j]
    i.e. each head's 128-wide column block is already folded.
    """
    f32 = jnp.float32

    # One fused projection for the four heads (MXU; K is small, MXU is idle).
    z = (jnp.dot(v_ref[...], wv_ref[...], preferred_element_type=f32)
         + jnp.dot(a_ref[...], wa_ref[...], preferred_element_type=f32)
         + jnp.dot(t_ref[...], wt_ref[...], preferred_element_type=f32)
         + b_ref[...])                                     # (tm4, 4*128) f32

    gate_v = jnp.maximum(z[:, 0 * LANE:1 * LANE], 0.0)     # relu(W_hv(cat(v, t)))
    gate_a = jnp.maximum(z[:, 1 * LANE:2 * LANE], 0.0)     # relu(W_ha(cat(a, t)))
    proj_v = z[:, 2 * LANE:3 * LANE]                       # W_v(visual)
    proj_a = z[:, 3 * LANE:4 * LANE]                       # W_a(acoustic)
    h_m = gate_v * proj_v + gate_a * proj_a                # (tm4, 128) folded

    t = t_ref[...].astype(f32)                             # folded text (f32 math)
    ones_blk = ones_ref[...]                               # (128, 128) block-diag ones

    # Segmented per-logical-row sums over each h-lane group on the idle MXU;
    # results are broadcast across the group, ready for elementwise use.
    sum_tt = jnp.dot(t * t, ones_blk, preferred_element_type=f32)
    sum_hh = jnp.dot(h_m * h_m, ones_blk, preferred_element_type=f32)

    em_norm = jnp.sqrt(sum_tt)
    hm_norm = jnp.sqrt(sum_hh)
    hm_norm = jnp.where(hm_norm == 0.0, 1.0, hm_norm)
    # EUP approximate reciprocal (alpha is clamped to 1, so the error is tiny).
    thresh = em_norm * beta_shift * pl.reciprocal(hm_norm + EPS, approx=True)
    alpha = jnp.minimum(thresh, 1.0)

    xr = alpha * h_m + t                                   # residual

    # LayerNorm over each h-lane group (two-pass, biased variance).
    inv_h = 1.0 / h
    mean = jnp.dot(xr, ones_blk, preferred_element_type=f32) * inv_h
    xc = xr - mean
    var = jnp.dot(xc * xc, ones_blk, preferred_element_type=f32) * inv_h
    x_hat = xc * jax.lax.rsqrt(var + LN_EPS)

    ln = ln_ref[...]                                       # (2, 128): [gamma; beta] tiled
    out = x_hat * ln[0:1, :] + ln[1:2, :]

    # Dropout is identity in eval mode.
    o_ref[...] = out.astype(o_ref.dtype)                   # lane-dense (tm4, 128) store


def _pack_params(params, h, dv, da, fold, compute_dtype):
    """Fold 6 weight blocks, 4 biases and LN params into the kernel layout."""
    zv = jnp.zeros((dv, h), jnp.float32)
    za = jnp.zeros((da, h), jnp.float32)
    zt = jnp.zeros((h, h), jnp.float32)
    # heads = [gate_v, gate_a, proj_v, proj_a], each (d_src, h), x @ W layout.
    heads_v = jnp.stack([params["W_hv_v"], zv, params["W_v"], zv], axis=0)
    heads_a = jnp.stack([za, params["W_ha_a"], za, params["W_a"]], axis=0)
    heads_t = jnp.stack([params["W_hv_t"], params["W_ha_t"], zt, zt], axis=0)

    eye = jnp.eye(fold, dtype=jnp.float32)

    def fold_w(heads, d):
        # big[g*d + k, head*fold*h + G*h + j] = (g == G) * heads[head, k, j]
        big = jnp.einsum("gG,nkj->gknGj", eye, heads)
        return big.reshape(fold * d, 4 * fold * h).astype(compute_dtype)

    w_v = fold_w(heads_v, dv)                              # (fold*DV, 4*128)
    w_a = fold_w(heads_a, da)                              # (fold*DA, 4*128)
    w_t = fold_w(heads_t, h)                               # (128,     4*128)

    b_heads = jnp.concatenate(
        [params["b_hv"], params["b_ha"], params["b_v"], params["b_a"]], axis=0)   # (4, h)
    b_big = jnp.broadcast_to(b_heads[:, None, :], (4, fold, h))
    b_big = b_big.reshape(1, 4 * fold * h).astype(jnp.float32)                    # (1, 512)

    ln_big = jnp.concatenate(
        [jnp.tile(params["ln_gamma"], (1, fold)),
         jnp.tile(params["ln_beta"], (1, fold))], axis=0).astype(jnp.float32)     # (2, 128)

    lane = jnp.arange(fold * h)
    ones_blk = (lane[:, None] // h == lane[None, :] // h).astype(jnp.float32)     # (128, 128)
    return w_v, w_a, w_t, b_big, ln_big, ones_blk


def mag_forward(text, visual, acoustic, params, *, beta_shift=BETA_SHIFT,
                tile_rows=8192, compute_dtype=jnp.bfloat16,
                out_dtype=jnp.float32):
    """text: (B,S,H), visual: (B,S,DV), acoustic: (B,S,DA) -> (B,S,H)."""
    B, S, H = text.shape
    DV = visual.shape[-1]
    DA = acoustic.shape[-1]
    M = B * S

    assert LANE % H == 0, "folded layout assumes hidden_size divides 128"
    fold = LANE // H                                       # logical rows per vector row

    t2 = text.reshape(M, H)
    v2 = visual.reshape(M, DV)
    a2 = acoustic.reshape(M, DA)
    if M % fold:
        # TODO(synk): this pad is a full copy but is only hit when B*S % 4 != 0
        # (rare); the large per-tile pad of the previous version is gone.
        pad = fold - M % fold
        t2 = jnp.pad(t2, ((0, pad), (0, 0)))
        v2 = jnp.pad(v2, ((0, pad), (0, 0)))
        a2 = jnp.pad(a2, ((0, pad), (0, 0)))
    Mp = t2.shape[0]
    M4 = Mp // fold

    # Free row-major reshapes into the folded layout (no concat, no big pad):
    # folded row rr holds logical rows fold*rr .. fold*rr + fold-1.
    # (astype is a no-op if the caller already supplies compute_dtype streams.)
    t_f = t2.reshape(M4, fold * H).astype(compute_dtype)
    v_f = v2.reshape(M4, fold * DV).astype(compute_dtype)
    a_f = a2.reshape(M4, fold * DA).astype(compute_dtype)

    w_v, w_a, w_t, b_big, ln_big, ones_blk = _pack_params(
        params, H, DV, DA, fold, compute_dtype)

    # Row tile: amortizes the ~0.35us per-grid-step overhead, keeps the
    # double-buffered blocks + f32 z temporary well under the 32 MiB scoped
    # VMEM default, and keeps >= 2 grid steps whenever possible so v7x's two
    # TensorCores both get work via dimension_semantics=("parallel",).
    ROW_MULT = 16                          # covers f32 (8,128) and bf16 (16,128) tiling
    tm4_max = max(ROW_MULT, tile_rows // fold // ROW_MULT * ROW_MULT)
    if M4 <= ROW_MULT:
        tm4 = M4                           # single block == full array (always legal)
    else:
        tm4 = min(tm4_max, _round_up(pl.cdiv(M4, 2), ROW_MULT))
    grid = (pl.cdiv(M4, tm4),)

    zcols = 4 * fold * H                   # 512

    out = pl.pallas_call(
        functools.partial(mag_kernel, float(beta_shift), float(H)),
        out_shape=jax.ShapeDtypeStruct((M4, fold * H), out_dtype),
        grid=grid,
        in_specs=[
            pl.BlockSpec((tm4, fold * DV), lambda i: (i, 0)),      # folded visual
            pl.BlockSpec((tm4, fold * DA), lambda i: (i, 0)),      # folded acoustic
            pl.BlockSpec((tm4, fold * H), lambda i: (i, 0)),       # folded text
            pl.BlockSpec((fold * DV, zcols), lambda i: (0, 0)),    # packed W (visual)
            pl.BlockSpec((fold * DA, zcols), lambda i: (0, 0)),    # packed W (acoustic)
            pl.BlockSpec((fold * H, zcols), lambda i: (0, 0)),     # packed W (text)
            pl.BlockSpec((1, zcols), lambda i: (0, 0)),            # packed biases
            pl.BlockSpec((2, fold * H), lambda i: (0, 0)),         # LN gamma/beta (tiled)
            pl.BlockSpec((fold * H, fold * H), lambda i: (0, 0)),  # block-diag ones
        ],
        out_specs=pl.BlockSpec((tm4, fold * H), lambda i: (i, 0)),
        compiler_params=pltpu.CompilerParams(
            dimension_semantics=("parallel",)),
    )(v_f, a_f, t_f, w_v, w_a, w_t, b_big, ln_big, ones_blk)

    return out.reshape(Mp, H)[:M].reshape(B, S, H)


def mag_reference(text, visual, acoustic, params, *, beta_shift=BETA_SHIFT):
    """Pure-JAX reference mirroring the PyTorch forward (f32)."""
    wv_gate = jax.nn.relu(visual @ params["W_hv_v"] + text @ params["W_hv_t"]
                          + params["b_hv"][0])
    wa_gate = jax.nn.relu(acoustic @ params["W_ha_a"] + text @ params["W_ha_t"]
                          + params["b_ha"][0])
    h_m = wv_gate * (visual @ params["W_v"] + params["b_v"][0]) + \
          wa_gate * (acoustic @ params["W_a"] + params["b_a"][0])
    em_norm = jnp.linalg.norm(text, axis=-1)
    hm_norm = jnp.linalg.norm(h_m, axis=-1)
    hm_norm = jnp.where(hm_norm == 0.0, 1.0, hm_norm)
    alpha = jnp.minimum(em_norm / (hm_norm + EPS) * beta_shift, 1.0)[..., None]
    x = alpha * h_m + text
    mean = jnp.mean(x, axis=-1, keepdims=True)
    var = jnp.mean((x - mean) ** 2, axis=-1, keepdims=True)
    x_hat = (x - mean) / jnp.sqrt(var + LN_EPS)
    return x_hat * params["ln_gamma"][0] + params["ln_beta"][0]


def init_params(key):
    ks = jax.random.split(key, 8)
    scale = 0.05
    return {
        # W_hv acts on cat(visual, text): split into visual part and text part.
        "W_hv_v": scale * jax.random.normal(ks[0], (VISUAL_DIM, TEXT_DIM), jnp.float32),
        "W_hv_t": scale * jax.random.normal(ks[1], (TEXT_DIM, TEXT_DIM), jnp.float32),
        "b_hv": jnp.zeros((1, TEXT_DIM), jnp.float32),
        "W_ha_a": scale * jax.random.normal(ks[2], (ACOUSTIC_DIM, TEXT_DIM), jnp.float32),
        "W_ha_t": scale * jax.random.normal(ks[3], (TEXT_DIM, TEXT_DIM), jnp.float32),
        "b_ha": jnp.zeros((1, TEXT_DIM), jnp.float32),
        "W_v": scale * jax.random.normal(ks[4], (VISUAL_DIM, TEXT_DIM), jnp.float32),
        "b_v": 0.01 * jnp.ones((1, TEXT_DIM), jnp.float32),
        "W_a": scale * jax.random.normal(ks[5], (ACOUSTIC_DIM, TEXT_DIM), jnp.float32),
        "b_a": 0.01 * jnp.ones((1, TEXT_DIM), jnp.float32),
        "ln_gamma": jnp.ones((1, TEXT_DIM), jnp.float32),
        "ln_beta": jnp.zeros((1, TEXT_DIM), jnp.float32),
    }


if __name__ == "__main__":
    key = jax.random.PRNGKey(0)
    k_t, k_v, k_a, k_p = jax.random.split(key, 4)
    params = init_params(k_p)

    # Small shape (single grid step, full-array blocks).
    B, S = 2, 8
    text = jax.random.normal(k_t, (B, S, TEXT_DIM), jnp.float32)
    visual = jax.random.normal(k_v, (B, S, VISUAL_DIM), jnp.float32)
    acoustic = jax.random.normal(k_a, (B, S, ACOUSTIC_DIM), jnp.float32)
    ref = mag_reference(text, visual, acoustic, params)

    # f32 compute path (tolerance covers the EUP approximate reciprocal in alpha).
    out_f32 = jax.block_until_ready(
        mag_forward(text, visual, acoustic, params, compute_dtype=jnp.float32))
    assert out_f32.shape == (B, S, TEXT_DIM)
    assert jnp.allclose(out_f32, ref, atol=2e-2, rtol=2e-2), "f32 mismatch vs reference"

    # Default bf16 compute path (halved HBM read traffic), loose tolerance.
    out_bf16 = jax.block_until_ready(
        mag_forward(text, visual, acoustic, params))
    assert jnp.allclose(out_bf16, ref, atol=1e-1, rtol=1e-1), "bf16 mismatch vs reference"

    # Larger ragged shape: >= 2 grid steps (v7x two-TensorCore sharding) and a
    # partial last row-tile handled without any wrapper-side padding.
    B2, S2 = 4, 100
    kt2, kv2, ka2 = jax.random.split(jax.random.PRNGKey(1), 3)
    text2 = jax.random.normal(kt2, (B2, S2, TEXT_DIM), jnp.float32)
    visual2 = jax.random.normal(kv2, (B2, S2, VISUAL_DIM), jnp.float32)
    acoustic2 = jax.random.normal(ka2, (B2, S2, ACOUSTIC_DIM), jnp.float32)
    ref2 = mag_reference(text2, visual2, acoustic2, params)
    out2 = jax.block_until_ready(mag_forward(text2, visual2, acoustic2, params))
    assert out2.shape == (B2, S2, TEXT_DIM)
    assert jnp.allclose(out2, ref2, atol=1e-1, rtol=1e-1), "bf16 multi-tile mismatch"

    # TODO(synk): dropout is treated as identity (eval mode); training-mode
    # dropout would use pltpu.prng_seed / prng_random_bits in-kernel.
    print("KERNEL_OK")
</pallas_src>

<mosaic_0001>
module attributes {stable_mosaic.version = 11 : i64} {
  func.func @mag_kernel(%arg0: i32, %arg1: memref<4x64xf32, #tpu.memory_space<vmem>>, %arg2: memref<4x64xf32, #tpu.memory_space<vmem>>, %arg3: memref<4x128xf32, #tpu.memory_space<vmem>>, %arg4: memref<64x512xf32, #tpu.memory_space<vmem>>, %arg5: memref<64x512xf32, #tpu.memory_space<vmem>>, %arg6: memref<128x512xf32, #tpu.memory_space<vmem>>, %arg7: memref<1x512xf32, #tpu.memory_space<vmem>>, %arg8: memref<2x128xf32, #tpu.memory_space<vmem>>, %arg9: memref<128x128xf32, #tpu.memory_space<vmem>>, %arg10: memref<4x128xf32, #tpu.memory_space<vmem>>) attributes {dimension_semantics = [#tpu.dimension_semantics<parallel>], iteration_bounds = array<i64: 1>, scalar_prefetch = 0 : i64, scratch_operands = 0 : i64, tpu.core_type = #tpu.core_type<tc>, window_params = [{transform_indices = @transform_0, window_bounds = array<i64: 4, 64>}, {transform_indices = @transform_1, window_bounds = array<i64: 4, 64>}, {transform_indices = @transform_2, window_bounds = array<i64: 4, 128>}, {pipeline_mode = #tpu.pipeline_mode<synchronous>, transform_indices = @transform_3, window_bounds = array<i64: 64, 512>}, {pipeline_mode = #tpu.pipeline_mode<synchronous>, transform_indices = @transform_4, window_bounds = array<i64: 64, 512>}, {pipeline_mode = #tpu.pipeline_mode<synchronous>, transform_indices = @transform_5, window_bounds = array<i64: 128, 512>}, {pipeline_mode = #tpu.pipeline_mode<synchronous>, transform_indices = @transform_6, window_bounds = array<i64: 1, 512>}, {pipeline_mode = #tpu.pipeline_mode<synchronous>, transform_indices = @transform_7, window_bounds = array<i64: 2, 128>}, {pipeline_mode = #tpu.pipeline_mode<synchronous>, transform_indices = @transform_8, window_bounds = array<i64: 128, 128>}, {transform_indices = @transform_9, window_bounds = array<i64: 4, 128>}]} {
    %c0 = arith.constant 0 : index
    %c0_0 = arith.constant 0 : index
    %0 = vector.load %arg1[%c0, %c0_0] : memref<4x64xf32, #tpu.memory_space<vmem>>, vector<4x64xf32>
    %c0_1 = arith.constant 0 : index
    %c0_2 = arith.constant 0 : index
    %1 = vector.load %arg4[%c0_1, %c0_2] : memref<64x512xf32, #tpu.memory_space<vmem>>, vector<64x512xf32>
    %cst = arith.constant dense<0.000000e+00> : vector<4x512xf32>
    %2 = tpu.matmul %0, %1, %cst {dimension_numbers = #tpu.dot_dimension_numbers<[1], [0], [0], [1], [0, 0, 1, 1], [], []>} : vector<4x64xf32>, vector<64x512xf32>, vector<4x512xf32> -> vector<4x512xf32>
    %c0_3 = arith.constant 0 : index
    %c0_4 = arith.constant 0 : index
    %3 = vector.load %arg2[%c0_3, %c0_4] : memref<4x64xf32, #tpu.memory_space<vmem>>, vector<4x64xf32>
    %c0_5 = arith.constant 0 : index
    %c0_6 = arith.constant 0 : index
    %4 = vector.load %arg5[%c0_5, %c0_6] : memref<64x512xf32, #tpu.memory_space<vmem>>, vector<64x512xf32>
    %cst_7 = arith.constant dense<0.000000e+00> : vector<4x512xf32>
    %5 = tpu.matmul %3, %4, %cst_7 {dimension_numbers = #tpu.dot_dimension_numbers<[1], [0], [0], [1], [0, 0, 1, 1], [], []>} : vector<4x64xf32>, vector<64x512xf32>, vector<4x512xf32> -> vector<4x512xf32>
    %6 = arith.addf %2, %5 : vector<4x512xf32>
    %c0_8 = arith.constant 0 : index
    %c0_9 = arith.constant 0 : index
    %7 = vector.load %arg3[%c0_8, %c0_9] : memref<4x128xf32, #tpu.memory_space<vmem>>, vector<4x128xf32>
    %c0_10 = arith.constant 0 : index
    %c0_11 = arith.constant 0 : index
    %8 = vector.load %arg6[%c0_10, %c0_11] : memref<128x512xf32, #tpu.memory_space<vmem>>, vector<128x512xf32>
    %cst_12 = arith.constant dense<0.000000e+00> : vector<4x512xf32>
    %9 = tpu.matmul %7, %8, %cst_12 {dimension_numbers = #tpu.dot_dimension_numbers<[1], [0], [0], [1], [0, 0, 1, 1], [], []>} : vector<4x128xf32>, vector<128x512xf32>, vector<4x512xf32> -> vector<4x512xf32>
    %10 = arith.addf %6, %9 : vector<4x512xf32>
    %c0_13 = arith.constant 0 : index
    %c0_14 = arith.constant 0 : index
    %11 = vector.load %arg7[%c0_13, %c0_14] : memref<1x512xf32, #tpu.memory_space<vmem>>, vector<1x512xf32>
    %12 = vector.broadcast %11 : vector<1x512xf32> to vector<4x512xf32>
    %13 = arith.addf %10, %12 : vector<4x512xf32>
    %14 = vector.extract_strided_slice %13 {offsets = [0, 0], sizes = [4, 128], strides = [1, 1]} : vector<4x512xf32> to vector<4x128xf32>
    %cst_15 = arith.constant 0.000000e+00 : f32
    %15 = vector.broadcast %cst_15 : f32 to vector<4x128xf32>
    %16 = arith.maximumf %14, %15 : vector<4x128xf32>
    %17 = vector.extract_strided_slice %13 {offsets = [0, 128], sizes = [4, 128], strides = [1, 1]} : vector<4x512xf32> to vector<4x128xf32>
    %cst_16 = arith.constant 0.000000e+00 : f32
    %18 = vector.broadcast %cst_16 : f32 to vector<4x128xf32>
    %19 = arith.maximumf %17, %18 : vector<4x128xf32>
    %20 = vector.extract_strided_slice %13 {offsets = [0, 256], sizes = [4, 128], strides = [1, 1]} : vector<4x512xf32> to vector<4x128xf32>
    %21 = vector.extract_strided_slice %13 {offsets = [0, 384], sizes = [4, 128], strides = [1, 1]} : vector<4x512xf32> to vector<4x128xf32>
    %22 = arith.mulf %16, %20 : vector<4x128xf32>
    %23 = arith.mulf %19, %21 : vector<4x128xf32>
    %24 = arith.addf %22, %23 : vector<4x128xf32>
    %c0_17 = arith.constant 0 : index
    %c0_18 = arith.constant 0 : index
    %25 = vector.load %arg3[%c0_17, %c0_18] : memref<4x128xf32, #tpu.memory_space<vmem>>, vector<4x128xf32>
    %c0_19 = arith.constant 0 : index
    %c0_20 = arith.constant 0 : index
    %26 = vector.load %arg9[%c0_19, %c0_20] : memref<128x128xf32, #tpu.memory_space<vmem>>, vector<128x128xf32>
    %27 = arith.mulf %25, %25 : vector<4x128xf32>
    %cst_21 = arith.constant dense<0.000000e+00> : vector<4x128xf32>
    %28 = tpu.matmul %27, %26, %cst_21 {dimension_numbers = #tpu.dot_dimension_numbers<[1], [0], [0], [1], [0, 0, 1, 1], [], []>} : vector<4x128xf32>, vector<128x128xf32>, vector<4x128xf32> -> vector<4x128xf32>
    %29 = arith.mulf %24, %24 : vector<4x128xf32>
    %cst_22 = arith.constant dense<0.000000e+00> : vector<4x128xf32>
    %30 = tpu.matmul %29, %26, %cst_22 {dimension_numbers = #tpu.dot_dimension_numbers<[1], [0], [0], [1], [0, 0, 1, 1], [], []>} : vector<4x128xf32>, vector<128x128xf32>, vector<4x128xf32> -> vector<4x128xf32>
    %31 = math.sqrt %28 : vector<4x128xf32>
    %32 = math.sqrt %30 : vector<4x128xf32>
    %cst_23 = arith.constant 0.000000e+00 : f32
    %33 = vector.broadcast %cst_23 : f32 to vector<4x128xf32>
    %34 = arith.cmpf oeq, %32, %33 : vector<4x128xf32>
    %cst_24 = arith.constant 1.000000e+00 : f32
    %35 = vector.broadcast %cst_24 : f32 to vector<4x128xf32>
    %36 = arith.select %34, %35, %32 : vector<4x128xi1>, vector<4x128xf32>
    %cst_25 = arith.constant 5.000000e-01 : f32
    %37 = vector.broadcast %cst_25 : f32 to vector<4x128xf32>
    %38 = arith.mulf %31, %37 : vector<4x128xf32>
    %cst_26 = arith.constant 9.99999997E-7 : f32
    %39 = vector.broadcast %cst_26 : f32 to vector<4x128xf32>
    %40 = arith.addf %36, %39 : vector<4x128xf32>
    %41 = tpu.reciprocal %40 {approx = true} : vector<4x128xf32> -> vector<4x128xf32>
    %42 = arith.mulf %38, %41 : vector<4x128xf32>
    %cst_27 = arith.constant 1.000000e+00 : f32
    %43 = vector.broadcast %cst_27 : f32 to vector<4x128xf32>
    %44 = arith.minimumf %42, %43 : vector<4x128xf32>
    %45 = arith.mulf %44, %24 : vector<4x128xf32>
    %46 = arith.addf %45, %25 : vector<4x128xf32>
    %cst_28 = arith.constant dense<0.000000e+00> : vector<4x128xf32>
    %47 = tpu.matmul %46, %26, %cst_28 {dimension_numbers = #tpu.dot_dimension_numbers<[1], [0], [0], [1], [0, 0, 1, 1], [], []>} : vector<4x128xf32>, vector<128x128xf32>, vector<4x128xf32> -> vector<4x128xf32>
    %cst_29 = arith.constant 3.125000e-02 : f32
    %48 = vector.broadcast %cst_29 : f32 to vector<4x128xf32>
    %49 = arith.mulf %47, %48 : vector<4x128xf32>
    %50 = arith.subf %46, %49 : vector<4x128xf32>
    %51 = arith.mulf %50, %50 : vector<4x128xf32>
    %cst_30 = arith.constant dense<0.000000e+00> : vector<4x128xf32>
    %52 = tpu.matmul %51, %26, %cst_30 {dimension_numbers = #tpu.dot_dimension_numbers<[1], [0], [0], [1], [0, 0, 1, 1], [], []>} : vector<4x128xf32>, vector<128x128xf32>, vector<4x128xf32> -> vector<4x128xf32>
    %cst_31 = arith.constant 3.125000e-02 : f32
    %53 = vector.broadcast %cst_31 : f32 to vector<4x128xf32>
    %54 = arith.mulf %52, %53 : vector<4x128xf32>
    %cst_32 = arith.constant 9.99999974E-6 : f32
    %55 = vector.broadcast %cst_32 : f32 to vector<4x128xf32>
    %56 = arith.addf %54, %55 : vector<4x128xf32>
    %57 = math.rsqrt %56 : vector<4x128xf32>
    %58 = arith.mulf %50, %57 : vector<4x128xf32>
    %c0_33 = arith.constant 0 : index
    %c0_34 = arith.constant 0 : index
    %59 = vector.load %arg8[%c0_33, %c0_34] : memref<2x128xf32, #tpu.memory_space<vmem>>, vector<2x128xf32>
    %60 = vector.extract_strided_slice %59 {offsets = [0, 0], sizes = [1, 128], strides = [1, 1]} : vector<2x128xf32> to vector<1x128xf32>
    %61 = vector.broadcast %60 : vector<1x128xf32> to vector<4x128xf32>
    %62 = arith.mulf %58, %61 : vector<4x128xf32>
    %63 = vector.extract_strided_slice %59 {offsets = [1, 0], sizes = [1, 128], strides = [1, 1]} : vector<2x128xf32> to vector<1x128xf32>
    %64 = vector.broadcast %63 : vector<1x128xf32> to vector<4x128xf32>
    %65 = arith.addf %62, %64 : vector<4x128xf32>
    %c0_35 = arith.constant 0 : index
    %c0_36 = arith.constant 0 : index
    %66 = vector.load %arg10[%c0_35, %c0_36] : memref<4x128xf32, #tpu.memory_space<vmem>>, vector<4x128xf32>
    tpu.vector_store %arg10[%c0_35, %c0_36], %65 {strides = array<i32>} : memref<4x128xf32, #tpu.memory_space<vmem>>, vector<4x128xf32>,
    return
  }
  func.func @transform_0(%arg0: i32) -> (i32, i32) {
    %c0_i32 = arith.constant 0 : i32
    %c0_i32_0 = arith.constant 0 : i32
    return %arg0, %c0_i32 : i32, i32
  }
  func.func @transform_1(%arg0: i32) -> (i32, i32) {
    %c0_i32 = arith.constant 0 : i32
    %c0_i32_0 = arith.constant 0 : i32
    return %arg0, %c0_i32 : i32, i32
  }
  func.func @transform_2(%arg0: i32) -> (i32, i32) {
    %c0_i32 = arith.constant 0 : i32
    %c0_i32_0 = arith.constant 0 : i32
    return %arg0, %c0_i32 : i32, i32
  }
  func.func @transform_3(%arg0: i32) -> (i32, i32) {
    %c0_i32 = arith.constant 0 : i32
    %c0_i32_0 = arith.constant 0 : i32
    %c0_i32_1 = arith.constant 0 : i32
    return %c0_i32, %c0_i32_0 : i32, i32
  }
  func.func @transform_4(%arg0: i32) -> (i32, i32) {
    %c0_i32 = arith.constant 0 : i32
    %c0_i32_0 = arith.constant 0 : i32
    %c0_i32_1 = arith.constant 0 : i32
    return %c0_i32, %c0_i32_0 : i32, i32
  }
  func.func @transform_5(%arg0: i32) -> (i32, i32) {
    %c0_i32 = arith.constant 0 : i32
    %c0_i32_0 = arith.constant 0 : i32
    %c0_i32_1 = arith.constant 0 : i32
    return %c0_i32, %c0_i32_0 : i32, i32
  }
  func.func @transform_6(%arg0: i32) -> (i32, i32) {
    %c0_i32 = arith.constant 0 : i32
    %c0_i32_0 = arith.constant 0 : i32
    %c0_i32_1 = arith.constant 0 : i32
    return %c0_i32, %c0_i32_0 : i32, i32
  }
  func.func @transform_7(%arg0: i32) -> (i32, i32) {
    %c0_i32 = arith.constant 0 : i32
    %c0_i32_0 = arith.constant 0 : i32
    %c0_i32_1 = arith.constant 0 : i32
    return %c0_i32, %c0_i32_0 : i32, i32
  }
  func.func @transform_8(%arg0: i32) -> (i32, i32) {
    %c0_i32 = arith.constant 0 : i32
    %c0_i32_0 = arith.constant 0 : i32
    %c0_i32_1 = arith.constant 0 : i32
    return %c0_i32, %c0_i32_0 : i32, i32
  }
  func.func @transform_9(%arg0: i32) -> (i32, i32) {
    %c0_i32 = arith.constant 0 : i32
    %c0_i32_0 = arith.constant 0 : i32
    return %arg0, %c0_i32 : i32, i32
  }
}

</mosaic_0001>

<llo_original>
// kernel: tpu_custom_call.1
$region0: #{tpu_custom_call.1}
  #allocation0 [shape = 'u32[]', space=smem, size = 0x4, offset = 0x4, fixed_abs, tag = 'smem constant byte address 0x4 - core index']
  #allocation1 [shape = 'u32[72,128]{1,0:T(1,128)}', space=vmem, size = 0x9000, scoped, tag = 'internal scratch']
  %s0 = inlined_call_operand.hbm [shape: f32[4,64], index: 0, kind: input, shape index: {}]
  %s1 = inlined_call_operand.hbm [shape: f32[4,64], index: 1, kind: input, shape index: {}]
  %s2 = inlined_call_operand.hbm [shape: f32[4,128], index: 2, kind: input, shape index: {}]
  %s3 = inlined_call_operand.hbm [shape: f32[64,512], index: 3, kind: input, shape index: {}]
  %s4 = inlined_call_operand.hbm [shape: f32[64,512], index: 4, kind: input, shape index: {}]
  %s5 = inlined_call_operand.hbm [shape: f32[128,512], index: 5, kind: input, shape index: {}]
  %s6 = inlined_call_operand.vmem [shape: f32[1,512], index: 6, kind: input, shape index: {}]
  %s7 = inlined_call_operand.vmem [shape: f32[2,128], index: 7, kind: input, shape index: {}]
  %s8 = inlined_call_operand.hbm [shape: f32[128,128], index: 8, kind: input, shape index: {}]
  %s9 = inlined_call_operand.hbm [shape: f32[4,128], index: 9, kind: output, shape index: {}]
  %s10 = sld [smem:[#allocation0]]
  $region74: #{tpu_custom_call.1} parent=0
    _
  %s12 = ssub.s32 1, %s10
  %s13 = scalar_select 0, %s12, %s10
  $region1: #{tpu_custom_call.1} parent=0
    #allocation2 [shape = 'u8[2048]{0}', space=vmem, size = 0x800, scoped, tag = 'input window, operand 0, single buffered']
    #allocation3 [shape = 's32[1]{0}', space=sflag, size = 0x4, scoped, tag = 'scoped memory for tpu_custom_call.1']
    #allocation4 [shape = 's32[1]{0}', space=sflag, size = 0x4, scoped, tag = 'scoped memory for tpu_custom_call.1']
    #allocation5 [shape = 'u8[2048]{0}', space=vmem, size = 0x800, scoped, tag = 'input window, operand 1, single buffered']
    #allocation6 [shape = 's32[1]{0}', space=sflag, size = 0x4, scoped, tag = 'scoped memory for tpu_custom_call.1']
    #allocation7 [shape = 'u8[2048]{0}', space=vmem, size = 0x800, scoped, tag = 'input window, operand 2, single buffered']
    #allocation8 [shape = 'u8[131072]{0}', space=vmem, size = 0x20000, scoped, tag = 'input window, operand 3, single buffered']
    #allocation9 [shape = 's32[1]{0}', space=sflag, size = 0x4, scoped, tag = 'scoped memory for tpu_custom_call.1']
    #allocation10 [shape = 'u8[131072]{0}', space=vmem, size = 0x20000, scoped, tag = 'input window, operand 4, single buffered']
    #allocation11 [shape = 'u8[262144]{0}', space=vmem, size = 0x40000, scoped, tag = 'input window, operand 5, single buffered']
    #allocation12 [shape = 's32[1]{0}', space=sflag, size = 0x4, scoped, tag = 'scoped memory for tpu_custom_call.1']
    #allocation13 [shape = 'u8[65536]{0}', space=vmem, size = 0x10000, scoped, tag = 'input window, operand 8, single buffered']
    #allocation14 [shape = 'u8[2048]{0}', space=vmem, size = 0x800, scoped, tag = 'output window, operand 0, single buffered']
    %14 = vsyncpa [#allocation3], 0
    %15 = vsyncpa [#allocation6], 0
    %16 = vsyncpa [#allocation9], 0
    %17 = vsyncpa [#allocation12], 0
    %18 = vsyncpa [#allocation4], 0
    // Predicated region
    $region2: #{tpu_custom_call.1} parent=1 // pred_check
      _
    $region3: #{tpu_custom_call.1} parent=1 // pred_check_branch
      %20 = sbr.rel (0) target = $region5
    $region4: #{tpu_custom_call.1} parent=1 // pred_region
      %22 = vsyncadd [#allocation3], 0
      %s24 = sshll.u32 %s0, 4
      %s25 = int_to_ptr.hbm [resolvable:$true] %s24
      %s26 = sshll.u32 [#allocation2], 4
      %s27 = int_to_ptr.vmem [resolvable:$true] %s26
      %29 = dma.hbm_to_vmem [thread:$0]  %s25, 64, %s27, [#allocation3]
    $region5: #{tpu_custom_call.1} parent=1 // pred_fallthru
      _
    // Predicated region
    $region6: #{tpu_custom_call.1} parent=1 // pred_check
      _
    $region7: #{tpu_custom_call.1} parent=1 // pred_check_branch
      %31 = sbr.rel (0) target = $region9
    $region8: #{tpu_custom_call.1} parent=1 // pred_region
      %33 = vsyncadd [#allocation6], 0
      %s35 = sshll.u32 %s1, 4
      %s36 = int_to_ptr.hbm [resolvable:$true] %s35
      %s37 = sshll.u32 [#allocation5], 4
      %s38 = int_to_ptr.vmem [resolvable:$true] %s37
      %40 = dma.hbm_to_vmem [thread:$0]  %s36, 64, %s38, [#allocation6]
    $region9: #{tpu_custom_call.1} parent=1 // pred_fallthru
      _
    // Predicated region
    $region10: #{tpu_custom_call.1} parent=1 // pred_check
      _
    $region11: #{tpu_custom_call.1} parent=1 // pred_check_branch
      %42 = sbr.rel (0) target = $region13
    $region12: #{tpu_custom_call.1} parent=1 // pred_region
      %44 = vsyncadd [#allocation6], 0
      %s46 = sshll.u32 %s2, 4
      %s47 = int_to_ptr.hbm [resolvable:$true] %s46
      %s48 = sshll.u32 [#allocation7], 4
      %s49 = int_to_ptr.vmem [resolvable:$true] %s48
      %51 = dma.hbm_to_vmem [thread:$0]  %s47, 64, %s49, [#allocation6]
    $region13: #{tpu_custom_call.1} parent=1 // pred_fallthru
      _
    // Predicated region
    $region14: #{tpu_custom_call.1} parent=1 // pred_check
      _
    $region15: #{tpu_custom_call.1} parent=1 // pred_check_branch
      %53 = sbr.rel (0) target = $region17
    $region16: #{tpu_custom_call.1} parent=1 // pred_region
      %55 = vsyncadd [#allocation9], 0
      %s56 = sshll.u32 %s3, 4
      %s57 = int_to_ptr.hbm [resolvable:$true] %s56
      %s58 = sshll.u32 [#allocation8], 4
      %s59 = int_to_ptr.vmem [resolvable:$true] %s58
      %64 = dma.hbm_to_vmem [thread:$0]  %s57, 4096, %s59, [#allocation9], 512, 512, 32
    $region17: #{tpu_custom_call.1} parent=1 // pred_fallthru
      _
    // Predicated region
    $region18: #{tpu_custom_call.1} parent=1 // pred_check
      _
    $region19: #{tpu_custom_call.1} parent=1 // pred_check_branch
      %66 = sbr.rel (0) target = $region21
    $region20: #{tpu_custom_call.1} parent=1 // pred_region
      %68 = vsyncadd [#allocation9], 0
      %s69 = sshll.u32 %s4, 4
      %s70 = int_to_ptr.hbm [resolvable:$true] %s69
      %s71 = sshll.u32 [#allocation10], 4
      %s72 = int_to_ptr.vmem [resolvable:$true] %s71
      %77 = dma.hbm_to_vmem [thread:$0]  %s70, 4096, %s72, [#allocation9], 512, 512, 32
    $region21: #{tpu_custom_call.1} parent=1 // pred_fallthru
      _
    // Predicated region
    $region22: #{tpu_custom_call.1} parent=1 // pred_check
      _
    $region23: #{tpu_custom_call.1} parent=1 // pred_check_branch
      %79 = sbr.rel (0) target = $region25
    $region24: #{tpu_custom_call.1} parent=1 // pred_region
      %81 = vsyncadd [#allocation12], 0
      %s82 = sshll.u32 %s5, 4
      %s83 = int_to_ptr.hbm [resolvable:$true] %s82
      %s84 = sshll.u32 [#allocation11], 4
      %s85 = int_to_ptr.vmem [resolvable:$true] %s84
      %90 = dma.hbm_to_vmem [thread:$0]  %s83, 8192, %s85, [#allocation12], 512, 512, 32
    $region25: #{tpu_custom_call.1} parent=1 // pred_fallthru
      _
    // Predicated region
    $region26: #{tpu_custom_call.1} parent=1 // pred_check
      _
    $region27: #{tpu_custom_call.1} parent=1 // pred_check_branch
      %92 = sbr.rel (0) target = $region29
    $region28: #{tpu_custom_call.1} parent=1 // pred_region
      _
    $region29: #{tpu_custom_call.1} parent=1 // pred_fallthru
      _
    // Predicated region
    $region30: #{tpu_custom_call.1} parent=1 // pred_check
      _
    $region31: #{tpu_custom_call.1} parent=1 // pred_check_branch
      %94 = sbr.rel (0) target = $region33
    $region32: #{tpu_custom_call.1} parent=1 // pred_region
      _
    $region33: #{tpu_custom_call.1} parent=1 // pred_fallthru
      _
    // Predicated region
    $region34: #{tpu_custom_call.1} parent=1 // pred_check
      _
    $region35: #{tpu_custom_call.1} parent=1 // pred_check_branch
      %96 = sbr.rel (0) target = $region37
    $region36: #{tpu_custom_call.1} parent=1 // pred_region
      %98 = vsyncadd [#allocation12], 0
      %s99 = sshll.u32 %s8, 4
      %s100 = int_to_ptr.hbm [resolvable:$true] %s99
      %s101 = sshll.u32 [#allocation13], 4
      %s102 = int_to_ptr.vmem [resolvable:$true] %s101
      %107 = dma.hbm_to_vmem [thread:$0]  %s100, 2048, %s102, [#allocation12], 128, 128, 8
    $region37: #{tpu_custom_call.1} parent=1 // pred_fallthru
      _
    // Predicated region
    $region38: #{tpu_custom_call.1} parent=1 // pred_check
      _
    $region39: #{tpu_custom_call.1} parent=1 // pred_check_branch
      %109 = sbr.rel (0) target = $region41
    $region40: #{tpu_custom_call.1} parent=1 // pred_region
      %111 = dma.done [#allocation3], 64
    $region41: #{tpu_custom_call.1} parent=1 // pred_fallthru
      _
    // Predicated region
    $region42: #{tpu_custom_call.1} parent=1 // pred_check
      _
    $region43: #{tpu_custom_call.1} parent=1 // pred_check_branch
      %113 = sbr.rel (0) target = $region45
    $region44: #{tpu_custom_call.1} parent=1 // pred_region
      %115 = dma.done [#allocation6], 64
    $region45: #{tpu_custom_call.1} parent=1 // pred_fallthru
      _
    // Predicated region
    $region46: #{tpu_custom_call.1} parent=1 // pred_check
      _
    $region47: #{tpu_custom_call.1} parent=1 // pred_check_branch
      %117 = sbr.rel (0) target = $region49
    $region48: #{tpu_custom_call.1} parent=1 // pred_region
      %119 = dma.done [#allocation6], 64
    $region49: #{tpu_custom_call.1} parent=1 // pred_fallthru
      _
    // Predicated region
    $region50: #{tpu_custom_call.1} parent=1 // pred_check
      _
    $region51: #{tpu_custom_call.1} parent=1 // pred_check_branch
      %121 = sbr.rel (0) target = $region53
    $region52: #{tpu_custom_call.1} parent=1 // pred_region
      %123 = dma.done [#allocation9], 4096
    $region53: #{tpu_custom_call.1} parent=1 // pred_fallthru
      _
    // Predicated region
    $region54: #{tpu_custom_call.1} parent=1 // pred_check
      _
    $region55: #{tpu_custom_call.1} parent=1 // pred_check_branch
      %125 = sbr.rel (0) target = $region57
    $region56: #{tpu_custom_call.1} parent=1 // pred_region
      %127 = dma.done [#allocation9], 4096
    $region57: #{tpu_custom_call.1} parent=1 // pred_fallthru
      _
    // Predicated region
    $region58: #{tpu_custom_call.1} parent=1 // pred_check
      _
    $region59: #{tpu_custom_call.1} parent=1 // pred_check_branch
      %129 = sbr.rel (0) target = $region61
    $region60: #{tpu_custom_call.1} parent=1 // pred_region
      %131 = dma.done [#allocation12], 8192
    $region61: #{tpu_custom_call.1} parent=1 // pred_fallthru
      _
    // Predicated region
    $region62: #{tpu_custom_call.1} parent=1 // pred_check
      _
    $region63: #{tpu_custom_call.1} parent=1 // pred_check_branch
      %133 = sbr.rel (0) target = $region65
    $region64: #{tpu_custom_call.1} parent=1 // pred_region
      %135 = dma.done [#allocation12], 2048
    $region65: #{tpu_custom_call.1} parent=1 // pred_fallthru
      _
    %v136 = vld [vmem:[#allocation2] sm:$0xf]
    %v137 = vld [vmem:[#allocation8] sm:$0xff]
    %v138 = vld [vmem:[#allocation8 + $0x8] sm:$0xff]
    %v139 = vld [vmem:[#allocation8 + $0x10] sm:$0xff]
    %v140 = vld [vmem:[#allocation8 + $0x18] sm:$0xff]
    %v141 = vld [vmem:[#allocation8 + $0x20] sm:$0xff]
    %v142 = vld [vmem:[#allocation8 + $0x28] sm:$0xff]
    %v143 = vld [vmem:[#allocation8 + $0x30] sm:$0xff]
    %v144 = vld [vmem:[#allocation8 + $0x38] sm:$0xff]
    %v145 = vld [vmem:[#allocation8 + $0x40] sm:$0xff]
    %v146 = vld [vmem:[#allocation8 + $0x48] sm:$0xff]
    %v147 = vld [vmem:[#allocation8 + $0x50] sm:$0xff]
    %v148 = vld [vmem:[#allocation8 + $0x58] sm:$0xff]
    %v149 = vld [vmem:[#allocation8 + $0x60] sm:$0xff]
    %v150 = vld [vmem:[#allocation8 + $0x68] sm:$0xff]
    %v151 = vld [vmem:[#allocation8 + $0x70] sm:$0xff]
    %v152 = vld [vmem:[#allocation8 + $0x78] sm:$0xff]
    %v153 = vld [vmem:[#allocation8 + $0x80] sm:$0xff]
    %v154 = vld [vmem:[#allocation8 + $0x88] sm:$0xff]
    %v155 = vld [vmem:[#allocation8 + $0x90] sm:$0xff]
    %v156 = vld [vmem:[#allocation8 + $0x98] sm:$0xff]
    %v157 = vld [vmem:[#allocation8 + $0xa0] sm:$0xff]
    %v158 = vld [vmem:[#allocation8 + $0xa8] sm:$0xff]
    %v159 = vld [vmem:[#allocation8 + $0xb0] sm:$0xff]
    %v160 = vld [vmem:[#allocation8 + $0xb8] sm:$0xff]
    %v161 = vld [vmem:[#allocation8 + $0xc0] sm:$0xff]
    %v162 = vld [vmem:[#allocation8 + $0xc8] sm:$0xff]
    %v163 = vld [vmem:[#allocation8 + $0xd0] sm:$0xff]
    %v164 = vld [vmem:[#allocation8 + $0xd8] sm:$0xff]
    %v165 = vld [vmem:[#allocation8 + $0xe0] sm:$0xff]
    %v166 = vld [vmem:[#allocation8 + $0xe8] sm:$0xff]
    %v167 = vld [vmem:[#allocation8 + $0xf0] sm:$0xff]
    %v168 = vld [vmem:[#allocation8 + $0xf8] sm:$0xff]
    %v169 = vld [vmem:[#allocation5] sm:$0xf]
    %v170 = vld [vmem:[#allocation10] sm:$0xff]
    %v171 = vld [vmem:[#allocation10 + $0x8] sm:$0xff]
    %v172 = vld [vmem:[#allocation10 + $0x10] sm:$0xff]
    %v173 = vld [vmem:[#allocation10 + $0x18] sm:$0xff]
    %v174 = vld [vmem:[#allocation10 + $0x20] sm:$0xff]
    %v175 = vld [vmem:[#allocation10 + $0x28] sm:$0xff]
    %v176 = vld [vmem:[#allocation10 + $0x30] sm:$0xff]
    %v177 = vld [vmem:[#allocation10 + $0x38] sm:$0xff]
    %v178 = vld [vmem:[#allocation10 + $0x40] sm:$0xff]
    %v179 = vld [vmem:[#allocation10 + $0x48] sm:$0xff]
    %v180 = vld [vmem:[#allocation10 + $0x50] sm:$0xff]
    %v181 = vld [vmem:[#allocation10 + $0x58] sm:$0xff]
    %v182 = vld [vmem:[#allocation10 + $0x60] sm:$0xff]
    %v183 = vld [vmem:[#allocation10 + $0x68] sm:$0xff]
    %v184 = vld [vmem:[#allocation10 + $0x70] sm:$0xff]
    %v185 = vld [vmem:[#allocation10 + $0x78] sm:$0xff]
    %v186 = vld [vmem:[#allocation10 + $0x80] sm:$0xff]
    %v187 = vld [vmem:[#allocation10 + $0x88] sm:$0xff]
    %v188 = vld [vmem:[#allocation10 + $0x90] sm:$0xff]
    %v189 = vld [vmem:[#allocation10 + $0x98] sm:$0xff]
    %v190 = vld [vmem:[#allocation10 + $0xa0] sm:$0xff]
    %v191 = vld [vmem:[#allocation10 + $0xa8] sm:$0xff]
    %v192 = vld [vmem:[#allocation10 + $0xb0] sm:$0xff]
    %v193 = vld [vmem:[#allocation10 + $0xb8] sm:$0xff]
    %v194 = vld [vmem:[#allocation10 + $0xc0] sm:$0xff]
    %v195 = vld [vmem:[#allocation10 + $0xc8] sm:$0xff]
    %v196 = vld [vmem:[#allocation10 + $0xd0] sm:$0xff]
    %v197 = vld [vmem:[#allocation10 + $0xd8] sm:$0xff]
    %v198 = vld [vmem:[#allocation10 + $0xe0] sm:$0xff]
    %v199 = vld [vmem:[#allocation10 + $0xe8] sm:$0xff]
    %v200 = vld [vmem:[#allocation10 + $0xf0] sm:$0xff]
    %v201 = vld [vmem:[#allocation10 + $0xf8] sm:$0xff]
    %vm202 = vcmask 523264
    %v204 = vsel %vm202, %v169, 0
    %206 = vmatpush.msra.mxu0 0.0
    %207 = vmatpush.msra.mxu0 0.0
    %208 = vmatpush.msra.mxu0 0.0
    %209 = vmatpush.msra.mxu0 0.0
    %210 = vmatpush.msra.mxu0 0.0
    %211 = vmatpush.msra.mxu0 0.0
    %212 = vmatpush.msra.mxu0 0.0
    %213 = vmatpush.msra.mxu0 0.0
    %214 = vmatpush.msra.mxu0 %v198
    %215 = vmatpush.msra.mxu0 %v194
    %216 = vmatpush.msra.mxu0 %v190
    %217 = vmatpush.msra.mxu0 %v186
    %218 = vmatpush.msra.mxu0 %v182
    %219 = vmatpush.msra.mxu0 %v178
    %220 = vmatpush.msra.mxu0 %v174
    %221 = vmatpush.msra.mxu0 %v170
    %222 = vmatmul.f32.gmra.mxu0 %v204
    %v223 = vpop.f32.mrf.mxu0
    %v224 = vadd.f32 0.0, %v223
    %225 = vdwg.mxu0
    %226 = vmatpush.msra.mxu0 0.0
    %227 = vmatpush.msra.mxu0 0.0
    %228 = vmatpush.msra.mxu0 0.0
    %229 = vmatpush.msra.mxu0 0.0
    %230 = vmatpush.msra.mxu0 0.0
    %231 = vmatpush.msra.mxu0 0.0
    %232 = vmatpush.msra.mxu0 0.0
    %233 = vmatpush.msra.mxu0 0.0
    %234 = vmatpush.msra.mxu0 %v199
    %235 = vmatpush.msra.mxu0 %v195
    %236 = vmatpush.msra.mxu0 %v191
    %237 = vmatpush.msra.mxu0 %v187
    %238 = vmatpush.msra.mxu0 %v183
    %239 = vmatpush.msra.mxu0 %v179
    %240 = vmatpush.msra.mxu0 %v175
    %241 = vmatpush.msra.mxu0 %v171
    %242 = vmatmul.f32.gmra.mxu0 %v204
    %v243 = vpop.f32.mrf.mxu0
    %v244 = vadd.f32 0.0, %v243
    %245 = vdwg.mxu0
    %246 = vmatpush.msra.mxu0 0.0
    %247 = vmatpush.msra.mxu0 0.0
    %248 = vmatpush.msra.mxu0 0.0
    %249 = vmatpush.msra.mxu0 0.0
    %250 = vmatpush.msra.mxu0 0.0
    %251 = vmatpush.msra.mxu0 0.0
    %252 = vmatpush.msra.mxu0 0.0
    %253 = vmatpush.msra.mxu0 0.0
    %254 = vmatpush.msra.mxu0 %v200
    %255 = vmatpush.msra.mxu0 %v196
    %256 = vmatpush.msra.mxu0 %v192
    %257 = vmatpush.msra.mxu0 %v188
    %258 = vmatpush.msra.mxu0 %v184
    %259 = vmatpush.msra.mxu0 %v180
    %260 = vmatpush.msra.mxu0 %v176
    %261 = vmatpush.msra.mxu0 %v172
    %262 = vmatmul.f32.gmra.mxu0 %v204
    %v263 = vpop.f32.mrf.mxu0
    %v264 = vadd.f32 0.0, %v263
    %265 = vdwg.mxu0
    %266 = vmatpush.msra.mxu0 0.0
    %267 = vmatpush.msra.mxu0 0.0
    %268 = vmatpush.msra.mxu0 0.0
    %269 = vmatpush.msra.mxu0 0.0
    %270 = vmatpush.msra.mxu0 0.0
    %271 = vmatpush.msra.mxu0 0.0
    %272 = vmatpush.msra.mxu0 0.0
    %273 = vmatpush.msra.mxu0 0.0
    %274 = vmatpush.msra.mxu0 %v201
    %275 = vmatpush.msra.mxu0 %v197
    %276 = vmatpush.msra.mxu0 %v193
    %277 = vmatpush.msra.mxu0 %v189
    %278 = vmatpush.msra.mxu0 %v185
    %279 = vmatpush.msra.mxu0 %v181
    %280 = vmatpush.msra.mxu0 %v177
    %281 = vmatpush.msra.mxu0 %v173
    %282 = vmatmul.f32.gmra.mxu0 %v204
    %v283 = vpop.f32.mrf.mxu0
    %v284 = vadd.f32 0.0, %v283
    %285 = vdwg.mxu0
    %v287 = vsel %vm202, %v136, 0
    %289 = vmatpush.msra.mxu0 0.0
    %290 = vmatpush.msra.mxu0 0.0
    %291 = vmatpush.msra.mxu0 0.0
    %292 = vmatpush.msra.mxu0 0.0
    %293 = vmatpush.msra.mxu0 0.0
    %294 = vmatpush.msra.mxu0 0.0
    %295 = vmatpush.msra.mxu0 0.0
    %296 = vmatpush.msra.mxu0 0.0
    %297 = vmatpush.msra.mxu0 %v165
    %298 = vmatpush.msra.mxu0 %v161
    %299 = vmatpush.msra.mxu0 %v157
    %300 = vmatpush.msra.mxu0 %v153
    %301 = vmatpush.msra.mxu0 %v149
    %302 = vmatpush.msra.mxu0 %v145
    %303 = vmatpush.msra.mxu0 %v141
    %304 = vmatpush.msra.mxu0 %v137
    %305 = vmatmul.f32.gmra.mxu0 %v287
    %v306 = vpop.f32.mrf.mxu0
    %v307 = vadd.f32 %v224, %v306
    %308 = vdwg.mxu0
    %309 = vmatpush.msra.mxu0 0.0
    %310 = vmatpush.msra.mxu0 0.0
    %311 = vmatpush.msra.mxu0 0.0
    %312 = vmatpush.msra.mxu0 0.0
    %313 = vmatpush.msra.mxu0 0.0
    %314 = vmatpush.msra.mxu0 0.0
    %315 = vmatpush.msra.mxu0 0.0
    %316 = vmatpush.msra.mxu0 0.0
    %317 = vmatpush.msra.mxu0 %v166
    %318 = vmatpush.msra.mxu0 %v162
    %319 = vmatpush.msra.mxu0 %v158
    %320 = vmatpush.msra.mxu0 %v154
    %321 = vmatpush.msra.mxu0 %v150
    %322 = vmatpush.msra.mxu0 %v146
    %323 = vmatpush.msra.mxu0 %v142
    %324 = vmatpush.msra.mxu0 %v138
    %325 = vmatmul.f32.gmra.mxu0 %v287
    %v326 = vpop.f32.mrf.mxu0
    %v327 = vadd.f32 %v244, %v326
    %328 = vdwg.mxu0
    %329 = vmatpush.msra.mxu0 0.0
    %330 = vmatpush.msra.mxu0 0.0
    %331 = vmatpush.msra.mxu0 0.0
    %332 = vmatpush.msra.mxu0 0.0
    %333 = vmatpush.msra.mxu0 0.0
    %334 = vmatpush.msra.mxu0 0.0
    %335 = vmatpush.msra.mxu0 0.0
    %336 = vmatpush.msra.mxu0 0.0
    %337 = vmatpush.msra.mxu0 %v167
    %338 = vmatpush.msra.mxu0 %v163
    %339 = vmatpush.msra.mxu0 %v159
    %340 = vmatpush.msra.mxu0 %v155
    %341 = vmatpush.msra.mxu0 %v151
    %342 = vmatpush.msra.mxu0 %v147
    %343 = vmatpush.msra.mxu0 %v143
    %344 = vmatpush.msra.mxu0 %v139
    %345 = vmatmul.f32.gmra.mxu0 %v287
    %v346 = vpop.f32.mrf.mxu0
    %v347 = vadd.f32 %v264, %v346
    %348 = vdwg.mxu0
    %349 = vmatpush.msra.mxu0 0.0
    %350 = vmatpush.msra.mxu0 0.0
    %351 = vmatpush.msra.mxu0 0.0
    %352 = vmatpush.msra.mxu0 0.0
    %353 = vmatpush.msra.mxu0 0.0
    %354 = vmatpush.msra.mxu0 0.0
    %355 = vmatpush.msra.mxu0 0.0
    %356 = vmatpush.msra.mxu0 0.0
    %357 = vmatpush.msra.mxu0 %v168
    %358 = vmatpush.msra.mxu0 %v164
    %359 = vmatpush.msra.mxu0 %v160
    %360 = vmatpush.msra.mxu0 %v156
    %361 = vmatpush.msra.mxu0 %v152
    %362 = vmatpush.msra.mxu0 %v148
    %363 = vmatpush.msra.mxu0 %v144
    %364 = vmatpush.msra.mxu0 %v140
    %365 = vmatmul.f32.gmra.mxu0 %v287
    %v366 = vpop.f32.mrf.mxu0
    %v367 = vadd.f32 %v284, %v366
    %368 = vdwg.mxu0
    %v369 = vld [vmem:[#allocation7] sm:$0xf]
    %v370 = vld [vmem:[#allocation11] sm:$0xff]
    %v371 = vld [vmem:[#allocation11 + $0x8] sm:$0xff]
    %v372 = vld [vmem:[#allocation11 + $0x10] sm:$0xff]
    %v373 = vld [vmem:[#allocation11 + $0x18] sm:$0xff]
    %v374 = vld [vmem:[#allocation11 + $0x20] sm:$0xff]
    %v375 = vld [vmem:[#allocation11 + $0x28] sm:$0xff]
    %v376 = vld [vmem:[#allocation11 + $0x30] sm:$0xff]
    %v377 = vld [vmem:[#allocation11 + $0x38] sm:$0xff]
    %v378 = vld [vmem:[#allocation11 + $0x40] sm:$0xff]
    %v379 = vld [vmem:[#allocation11 + $0x48] sm:$0xff]
    %v380 = vld [vmem:[#allocation11 + $0x50] sm:$0xff]
    %v381 = vld [vmem:[#allocation11 + $0x58] sm:$0xff]
    %v382 = vld [vmem:[#allocation11 + $0x60] sm:$0xff]
    %v383 = vld [vmem:[#allocation11 + $0x68] sm:$0xff]
    %v384 = vld [vmem:[#allocation11 + $0x70] sm:$0xff]
    %v385 = vld [vmem:[#allocation11 + $0x78] sm:$0xff]
    %v386 = vld [vmem:[#allocation11 + $0x80] sm:$0xff]
    %v387 = vld [vmem:[#allocation11 + $0x88] sm:$0xff]
    %v388 = vld [vmem:[#allocation11 + $0x90] sm:$0xff]
    %v389 = vld [vmem:[#allocation11 + $0x98] sm:$0xff]
    %v390 = vld [vmem:[#allocation11 + $0xa0] sm:$0xff]
    %v391 = vld [vmem:[#allocation11 + $0xa8] sm:$0xff]
    %v392 = vld [vmem:[#allocation11 + $0xb0] sm:$0xff]
    %v393 = vld [vmem:[#allocation11 + $0xb8] sm:$0xff]
    %v394 = vld [vmem:[#allocation11 + $0xc0] sm:$0xff]
    %v395 = vld [vmem:[#allocation11 + $0xc8] sm:$0xff]
    %v396 = vld [vmem:[#allocation11 + $0xd0] sm:$0xff]
    %v397 = vld [vmem:[#allocation11 + $0xd8] sm:$0xff]
    %v398 = vld [vmem:[#allocation11 + $0xe0] sm:$0xff]
    %v399 = vld [vmem:[#allocation11 + $0xe8] sm:$0xff]
    %v400 = vld [vmem:[#allocation11 + $0xf0] sm:$0xff]
    %v401 = vld [vmem:[#allocation11 + $0xf8] sm:$0xff]
    %v402 = vld [vmem:[#allocation11 + $0x100] sm:$0xff]
    %v403 = vld [vmem:[#allocation11 + $0x108] sm:$0xff]
    %v404 = vld [vmem:[#allocation11 + $0x110] sm:$0xff]
    %v405 = vld [vmem:[#allocation11 + $0x118] sm:$0xff]
    %v406 = vld [vmem:[#allocation11 + $0x120] sm:$0xff]
    %v407 = vld [vmem:[#allocation11 + $0x128] sm:$0xff]
    %v408 = vld [vmem:[#allocation11 + $0x130] sm:$0xff]
    %v409 = vld [vmem:[#allocation11 + $0x138] sm:$0xff]
    %v410 = vld [vmem:[#allocation11 + $0x140] sm:$0xff]
    %v411 = vld [vmem:[#allocation11 + $0x148] sm:$0xff]
    %v412 = vld [vmem:[#allocation11 + $0x150] sm:$0xff]
    %v413 = vld [vmem:[#allocation11 + $0x158] sm:$0xff]
    %v414 = vld [vmem:[#allocation11 + $0x160] sm:$0xff]
    %v415 = vld [vmem:[#allocation11 + $0x168] sm:$0xff]
    %v416 = vld [vmem:[#allocation11 + $0x170] sm:$0xff]
    %v417 = vld [vmem:[#allocation11 + $0x178] sm:$0xff]
    %v418 = vld [vmem:[#allocation11 + $0x180] sm:$0xff]
    %v419 = vld [vmem:[#allocation11 + $0x188] sm:$0xff]
    %v420 = vld [vmem:[#allocation11 + $0x190] sm:$0xff]
    %v421 = vld [vmem:[#allocation11 + $0x198] sm:$0xff]
    %v422 = vld [vmem:[#allocation11 + $0x1a0] sm:$0xff]
    %v423 = vld [vmem:[#allocation11 + $0x1a8] sm:$0xff]
    %v424 = vld [vmem:[#allocation11 + $0x1b0] sm:$0xff]
    %v425 = vld [vmem:[#allocation11 + $0x1b8] sm:$0xff]
    %v426 = vld [vmem:[#allocation11 + $0x1c0] sm:$0xff]
    %v427 = vld [vmem:[#allocation11 + $0x1c8] sm:$0xff]
    %v428 = vld [vmem:[#allocation11 + $0x1d0] sm:$0xff]
    %v429 = vld [vmem:[#allocation11 + $0x1d8] sm:$0xff]
    %v430 = vld [vmem:[#allocation11 + $0x1e0] sm:$0xff]
    %v431 = vld [vmem:[#allocation11 + $0x1e8] sm:$0xff]
    %v432 = vld [vmem:[#allocation11 + $0x1f0] sm:$0xff]
    %v433 = vld [vmem:[#allocation11 + $0x1f8] sm:$0xff]
    %434 = vmatpush.msra.mxu0 %v430
    %435 = vmatpush.msra.mxu0 %v426
    %436 = vmatpush.msra.mxu0 %v422
    %437 = vmatpush.msra.mxu0 %v418
    %438 = vmatpush.msra.mxu0 %v414
    %439 = vmatpush.msra.mxu0 %v410
    %440 = vmatpush.msra.mxu0 %v406
    %441 = vmatpush.msra.mxu0 %v402
    %442 = vmatpush.msra.mxu0 %v398
    %443 = vmatpush.msra.mxu0 %v394
    %444 = vmatpush.msra.mxu0 %v390
    %445 = vmatpush.msra.mxu0 %v386
    %446 = vmatpush.msra.mxu0 %v382
    %447 = vmatpush.msra.mxu0 %v378
    %448 = vmatpush.msra.mxu0 %v374
    %449 = vmatpush.msra.mxu0 %v370
    %450 = vmatmul.f32.gmra.mxu0 %v369
    %v451 = vpop.f32.mrf.mxu0
    %v452 = vadd.f32 0.0, %v451
    %453 = vdwg.mxu0
    %454 = vmatpush.msra.mxu0 %v431
    %455 = vmatpush.msra.mxu0 %v427
    %456 = vmatpush.msra.mxu0 %v423
    %457 = vmatpush.msra.mxu0 %v419
    %458 = vmatpush.msra.mxu0 %v415
    %459 = vmatpush.msra.mxu0 %v411
    %460 = vmatpush.msra.mxu0 %v407
    %461 = vmatpush.msra.mxu0 %v403
    %462 = vmatpush.msra.mxu0 %v399
    %463 = vmatpush.msra.mxu0 %v395
    %464 = vmatpush.msra.mxu0 %v391
    %465 = vmatpush.msra.mxu0 %v387
    %466 = vmatpush.msra.mxu0 %v383
    %467 = vmatpush.msra.mxu0 %v379
    %468 = vmatpush.msra.mxu0 %v375
    %469 = vmatpush.msra.mxu0 %v371
    %470 = vmatmul.f32.gmra.mxu0 %v369
    %v471 = vpop.f32.mrf.mxu0
    %v472 = vadd.f32 0.0, %v471
    %473 = vdwg.mxu0
    %474 = vmatpush.msra.mxu0 %v432
    %475 = vmatpush.msra.mxu0 %v428
    %476 = vmatpush.msra.mxu0 %v424
    %477 = vmatpush.msra.mxu0 %v420
    %478 = vmatpush.msra.mxu0 %v416
    %479 = vmatpush.msra.mxu0 %v412
    %480 = vmatpush.msra.mxu0 %v408
    %481 = vmatpush.msra.mxu0 %v404
    %482 = vmatpush.msra.mxu0 %v400
    %483 = vmatpush.msra.mxu0 %v396
    %484 = vmatpush.msra.mxu0 %v392
    %485 = vmatpush.msra.mxu0 %v388
    %486 = vmatpush.msra.mxu0 %v384
    %487 = vmatpush.msra.mxu0 %v380
    %488 = vmatpush.msra.mxu0 %v376
    %489 = vmatpush.msra.mxu0 %v372
    %490 = vmatmul.f32.gmra.mxu0 %v369
    %v491 = vpop.f32.mrf.mxu0
    %v492 = vadd.f32 0.0, %v491
    %493 = vdwg.mxu0
    %494 = vmatpush.msra.mxu0 %v433
    %495 = vmatpush.msra.mxu0 %v429
    %496 = vmatpush.msra.mxu0 %v425
    %497 = vmatpush.msra.mxu0 %v421
    %498 = vmatpush.msra.mxu0 %v417
    %499 = vmatpush.msra.mxu0 %v413
    %500 = vmatpush.msra.mxu0 %v409
    %501 = vmatpush.msra.mxu0 %v405
    %502 = vmatpush.msra.mxu0 %v401
    %503 = vmatpush.msra.mxu0 %v397
    %504 = vmatpush.msra.mxu0 %v393
    %505 = vmatpush.msra.mxu0 %v389
    %506 = vmatpush.msra.mxu0 %v385
    %507 = vmatpush.msra.mxu0 %v381
    %508 = vmatpush.msra.mxu0 %v377
    %509 = vmatpush.msra.mxu0 %v373
    %510 = vmatmul.f32.gmra.mxu0 %v369
    %v511 = vpop.f32.mrf.mxu0
    %v512 = vadd.f32 0.0, %v511
    %513 = vdwg.mxu0
    %v514 = vadd.f32 %v307, %v452
    %v515 = vadd.f32 %v327, %v472
    %v516 = vadd.f32 %v347, %v492
    %v517 = vadd.f32 %v367, %v512
    %v518 = vld [vmem:[%s6] sm:$0xf]
    %v520 = vperm.slane %v518, 0
    %v521 = vperm.slane %v518, 1
    %v522 = vperm.slane %v518, 2
    %v523 = vperm.slane %v518, 3
    %v528 = vadd.f32 %v514, %v520
    %v529 = vadd.f32 %v515, %v521
    %v530 = vadd.f32 %v516, %v522
    %v531 = vadd.f32 %v517, %v523
    %v532 = vmax.f32 %v528, 0.0
    %v533 = vmax.f32 %v529, 0.0
    %v534 = vmul.f32 %v532, %v530
    %v535 = vmul.f32 %v533, %v531
    %v536 = vadd.f32 %v534, %v535
    %v537 = vld [vmem:[#allocation13] sm:$0xff]
    %v538 = vld [vmem:[#allocation13 + $0x8] sm:$0xff]
    %v539 = vld [vmem:[#allocation13 + $0x10] sm:$0xff]
    %v540 = vld [vmem:[#allocation13 + $0x18] sm:$0xff]
    %v541 = vld [vmem:[#allocation13 + $0x20] sm:$0xff]
    %v542 = vld [vmem:[#allocation13 + $0x28] sm:$0xff]
    %v543 = vld [vmem:[#allocation13 + $0x30] sm:$0xff]
    %v544 = vld [vmem:[#allocation13 + $0x38] sm:$0xff]
    %v545 = vld [vmem:[#allocation13 + $0x40] sm:$0xff]
    %v546 = vld [vmem:[#allocation13 + $0x48] sm:$0xff]
    %v547 = vld [vmem:[#allocation13 + $0x50] sm:$0xff]
    %v548 = vld [vmem:[#allocation13 + $0x58] sm:$0xff]
    %v549 = vld [vmem:[#allocation13 + $0x60] sm:$0xff]
    %v550 = vld [vmem:[#allocation13 + $0x68] sm:$0xff]
    %v551 = vld [vmem:[#allocation13 + $0x70] sm:$0xff]
    %v552 = vld [vmem:[#allocation13 + $0x78] sm:$0xff]
    %v553 = vmul.f32 %v369, %v369
    %554 = vmatpush.msra.mxu0 %v552
    %555 = vmatpush.msra.mxu0 %v551
    %556 = vmatpush.msra.mxu0 %v550
    %557 = vmatpush.msra.mxu0 %v549
    %558 = vmatpush.msra.mxu0 %v548
    %559 = vmatpush.msra.mxu0 %v547
    %560 = vmatpush.msra.mxu0 %v546
    %561 = vmatpush.msra.mxu0 %v545
    %562 = vmatpush.msra.mxu0 %v544
    %563 = vmatpush.msra.mxu0 %v543
    %564 = vmatpush.msra.mxu0 %v542
    %565 = vmatpush.msra.mxu0 %v541
    %566 = vmatpush.msra.mxu0 %v540
    %567 = vmatpush.msra.mxu0 %v539
    %568 = vmatpush.msra.mxu0 %v538
    %569 = vmatpush.msra.mxu0 %v537
    %570 = vmatmul.f32.gmra.mxu0 %v553
    %v571 = vpop.f32.mrf.mxu0
    %v572 = vadd.f32 0.0, %v571
    %573 = vdwg.mxu0
    %v574 = vmul.f32 %v536, %v536
    %575 = vmatpush.msra.mxu0 %v552
    %576 = vmatpush.msra.mxu0 %v551
    %577 = vmatpush.msra.mxu0 %v550
    %578 = vmatpush.msra.mxu0 %v549
    %579 = vmatpush.msra.mxu0 %v548
    %580 = vmatpush.msra.mxu0 %v547
    %581 = vmatpush.msra.mxu0 %v546
    %582 = vmatpush.msra.mxu0 %v545
    %583 = vmatpush.msra.mxu0 %v544
    %584 = vmatpush.msra.mxu0 %v543
    %585 = vmatpush.msra.mxu0 %v542
    %586 = vmatpush.msra.mxu0 %v541
    %587 = vmatpush.msra.mxu0 %v540
    %588 = vmatpush.msra.mxu0 %v539
    %589 = vmatpush.msra.mxu0 %v538
    %590 = vmatpush.msra.mxu0 %v537
    %591 = vmatmul.f32.gmra.mxu0 %v574
    %v592 = vpop.f32.mrf.mxu0
    %v593 = vadd.f32 0.0, %v592
    %594 = vdwg.mxu0
    %v595 = vrsqrt.pop %v572
    %v596 = vmul.f32 %v595, %v572
    %v597 = vmul.f32 %v596, %v595
    %v598 = vmul.f32 0.5, %v597
    %v599 = vsub.f32 1.5, %v598
    %v600 = vmul.f32 %v595, %v599
    %v601 = vmul.f32 %v572, %v600
    %vm602 = vcmp.eq.f32.partialorder %v572, inf
    %v603 = vsel %vm602, %v572, %v601
    %vm604 = vcmp.eq.f32.partialorder %v572, 0.0
    %v605 = vand.u32 %v572, 2147483648
    %v606 = vsel %vm604, %v605, %v603
    %v607 = vrsqrt.pop %v593
    %v608 = vmul.f32 %v607, %v593
    %v609 = vmul.f32 %v608, %v607
    %v610 = vmul.f32 0.5, %v609
    %v611 = vsub.f32 1.5, %v610
    %v612 = vmul.f32 %v607, %v611
    %v613 = vmul.f32 %v593, %v612
    %vm614 = vcmp.eq.f32.partialorder %v593, inf
    %v615 = vsel %vm614, %v593, %v613
    %vm616 = vcmp.eq.f32.partialorder %v593, 0.0
    %v617 = vand.u32 %v593, 2147483648
    %v618 = vsel %vm616, %v617, %v615
    %vm619 = vcmp.eq.f32.partialorder %v618, 0.0
    %v620 = vsel %vm619, 1.0, %v618
    %v621 = vmul.f32 %v606, 0.5
    %v622 = vadd.f32 %v620, 1e-06
    %v623 = vrcp.pop %v622
    %v624 = vmul.f32 %v621, %v623
    %v625 = vmin.f32 %v624, 1.0
    %v626 = vmul.f32 %v625, %v536
    %v627 = vadd.f32 %v626, %v369
    %628 = vmatpush.msra.mxu0 %v552
    %629 = vmatpush.msra.mxu0 %v551
    %630 = vmatpush.msra.mxu0 %v550
    %631 = vmatpush.msra.mxu0 %v549
    %632 = vmatpush.msra.mxu0 %v548
    %633 = vmatpush.msra.mxu0 %v547
    %634 = vmatpush.msra.mxu0 %v546
    %635 = vmatpush.msra.mxu0 %v545
    %636 = vmatpush.msra.mxu0 %v544
    %637 = vmatpush.msra.mxu0 %v543
    %638 = vmatpush.msra.mxu0 %v542
    %639 = vmatpush.msra.mxu0 %v541
    %640 = vmatpush.msra.mxu0 %v540
    %641 = vmatpush.msra.mxu0 %v539
    %642 = vmatpush.msra.mxu0 %v538
    %643 = vmatpush.msra.mxu0 %v537
    %644 = vmatmul.f32.gmra.mxu0 %v627
    %v645 = vpop.f32.mrf.mxu0
    %v646 = vadd.f32 0.0, %v645
    %647 = vdwg.mxu0
    %v648 = vmul.f32 %v646, 0.03125
    %v649 = vsub.f32 %v627, %v648
    %v650 = vmul.f32 %v649, %v649
    %651 = vmatpush.msra.mxu0 %v552
    %652 = vmatpush.msra.mxu0 %v551
    %653 = vmatpush.msra.mxu0 %v550
    %654 = vmatpush.msra.mxu0 %v549
    %655 = vmatpush.msra.mxu0 %v548
    %656 = vmatpush.msra.mxu0 %v547
    %657 = vmatpush.msra.mxu0 %v546
    %658 = vmatpush.msra.mxu0 %v545
    %659 = vmatpush.msra.mxu0 %v544
    %660 = vmatpush.msra.mxu0 %v543
    %661 = vmatpush.msra.mxu0 %v542
    %662 = vmatpush.msra.mxu0 %v541
    %663 = vmatpush.msra.mxu0 %v540
    %664 = vmatpush.msra.mxu0 %v539
    %665 = vmatpush.msra.mxu0 %v538
    %666 = vmatpush.msra.mxu0 %v537
    %667 = vmatmul.f32.gmra.mxu0 %v650
    %v668 = vpop.f32.mrf.mxu0
    %v669 = vadd.f32 0.0, %v668
    %670 = vdwg.mxu0
    %v671 = vmul.f32 %v669, 0.03125
    %v672 = vadd.f32 %v671, 1e-05
    %v673 = vrsqrt.pop %v672
    %v674 = vmul.f32 %v673, %v672
    %v675 = vmul.f32 %v674, %v673
    %v676 = vmul.f32 0.5, %v675
    %v677 = vsub.f32 1.5, %v676
    %v678 = vmul.f32 %v673, %v677
    %vm679 = vweird.f32 %v672
    %vm680 = vweird.f32 %v673
    %vm681 = vmor %vm679, %vm680
    %v682 = vsel %vm681, %v673, %v678
    %v683 = vmul.f32 %v649, %v682
    %v684 = vld [vmem:[%s7] sm:$0x3]
    %v685 = vperm.slane %v684, 0
    %v686 = vmul.f32 %v683, %v685
    %v687 = vperm.slane %v684, 1
    %v688 = vadd.f32 %v686, %v687
    %689 = vst [vmem:[#allocation14] sm:$0xf] %v688
    // Predicated region
    $region66: #{tpu_custom_call.1} parent=1 // pred_check
      _
    $region67: #{tpu_custom_call.1} parent=1 // pred_check_branch
      %691 = sbr.rel (0) target = $region69
    $region68: #{tpu_custom_call.1} parent=1 // pred_region
      %693 = vsyncadd [#allocation4], 0
      %s695 = sshll.u32 [#allocation14], 4
      %s696 = int_to_ptr.vmem [resolvable:$true] %s695
      %s697 = sshll.u32 %s9, 4
      %s698 = int_to_ptr.hbm [resolvable:$true] %s697
      %700 = dma.vmem_to_hbm [thread:$0]  %s696, 64, %s698, [#allocation4]
    $region69: #{tpu_custom_call.1} parent=1 // pred_fallthru
      _
    // Predicated region
    $region70: #{tpu_custom_call.1} parent=1 // pred_check
      _
    $region71: #{tpu_custom_call.1} parent=1 // pred_check_branch
      %702 = sbr.rel (0) target = $region73
    $region72: #{tpu_custom_call.1} parent=1 // pred_region
      %704 = dma.done [#allocation4], 64
    $region73: #{tpu_custom_call.1} parent=1 // pred_fallthru
      _
    %705 = vsyncpa [#allocation3], 1
    %706 = vsyncpa [#allocation6], 1
    %707 = vsyncpa [#allocation9], 1
    %708 = vsyncpa [#allocation12], 1
    %709 = vsyncpa [#allocation4], 1

</llo_original>
